<compile_context>
chip_gen: v6e
topology: v6e:2x2x1
jax: 0.10.0
libtpu: 0.0.40
codegen_flags: <defaults>
</compile_context>

<pallas_src>
import functools

import jax
import jax.numpy as jnp
import numpy as np
from jax.experimental import pallas as pl
from jax.experimental.pallas import tpu as pltpu

HIDDEN = 128
EPS = 1e-5

VMEM_LIMIT = 32 * 1024 * 1024     # explicit scoped-VMEM limit: > v5e default (16 MiB),
                                  # <= v7x scoped default (32 MiB) / physical (64 MiB)
VMEM_HEADROOM = 4 * 1024 * 1024
TB_MIN = 128                      # batch-tile granule
TB_MAX = 8192


def _round_up(n, m):
    return ((n + m - 1) // m) * m


def _choose_tb(batch, d):
    """Batch-tile size from D and the VMEM budget (double-buffered x + h + resident w1)."""
    f32 = 4
    resident = 2 * d * HIDDEN * f32 + 4 * HIDDEN * f32 + 64      # w1.T (dbl-buffered), b1, w2, b2
    avail = VMEM_LIMIT - VMEM_HEADROOM - resident
    # Per batch row: double-buffered x tile + LayerNorm temps + h (+ elementwise temps) + out.
    per_row = 2 * d * f32 + 2 * d * f32 + 4 * HIDDEN * f32 + 2 * f32
    tb = max(avail // per_row, TB_MIN)
    tb = min(tb, TB_MAX)
    # v7x megacore: for big batches keep >= 2 grid steps so ("parallel",) shards the batch
    # across both TensorCores.  Only applied when each step still amortizes the ~0.35us
    # per-step overhead, so the extra step is noise on single-core v5e/v6e.
    if batch >= 2048:
        tb = min(tb, _round_up(pl.cdiv(batch, 2), TB_MIN))
    tb = max((tb // TB_MIN) * TB_MIN, TB_MIN)
    if tb >= batch:
        return batch              # one full block (block dim == array dim is always legal)
    return tb


def ffnet_kernel(x_ref, w1_ref, b1_ref, w2_ref, b2_ref, o_ref, *, norm_flag):
    # x_ref : (TB, D)     natural layout, contiguous DMA
    # w1_ref: (D, 128)    linear_1.weight transposed once in the wrapper, VMEM-resident
    # b1_ref: (1, 128)
    # w2_ref: (1, 128)    linear_2.weight, VMEM-resident
    # b2_ref: (1, 1)
    # o_ref : (TB, 1)
    x = x_ref[...].astype(jnp.float32)

    if norm_flag:
        # Two-pass LayerNorm over the feature (lane) axis; biased variance = nn.LayerNorm.
        inv_d = jnp.float32(1.0 / x.shape[-1])
        mean = jnp.sum(x, axis=-1, keepdims=True) * inv_d
        xc = x - mean
        var = jnp.sum(xc * xc, axis=-1, keepdims=True) * inv_d
        x = xc * jax.lax.rsqrt(var + EPS)

    # Linear 1 + ReLU on the MXU: (TB, D) @ (D, 128) -> (TB, 128), f32 accumulate.
    h = jnp.dot(x, w1_ref[...], preferred_element_type=jnp.float32) + b1_ref[...]
    h = jnp.maximum(h, 0.0)

    # Linear 2 (128 -> 1) + ReLU on the VPU/XLU: broadcast-multiply by the w2 row and reduce
    # over the feature axis (avoids an M=1 MXU op after matmul1).
    y = jnp.sum(h * w2_ref[...], axis=-1, keepdims=True) + b2_ref[...]
    y = jnp.maximum(y, 0.0)

    o_ref[...] = y.astype(o_ref.dtype)


def ffnet_forward(x, w1, b1, w2, b2, *, norm_flag, tb=None):
    """x: (B, D).  PyTorch layouts: w1 (128, D), b1 (128,), w2 (1, 128), b2 (1,)."""
    B, D = x.shape
    if tb is None:
        tb = _choose_tb(B, D)

    # Tiny one-time parameter reshapes (weights only, never the streamed activation x).
    w1t = w1.T.astype(x.dtype)                   # (D, 128)
    b1r = b1.reshape(1, HIDDEN).astype(x.dtype)
    w2r = w2.reshape(1, HIDDEN).astype(x.dtype)
    b2r = b2.reshape(1, 1).astype(x.dtype)

    grid = (pl.cdiv(B, tb),)

    return pl.pallas_call(
        functools.partial(ffnet_kernel, norm_flag=norm_flag),
        out_shape=jax.ShapeDtypeStruct((B, 1), x.dtype),
        grid=grid,
        in_specs=[
            pl.BlockSpec((tb, D), lambda i: (i, 0)),        # streamed x tiles (contiguous DMA)
            pl.BlockSpec((D, HIDDEN), lambda i: (0, 0)),    # w1.T: resident
            pl.BlockSpec((1, HIDDEN), lambda i: (0, 0)),    # b1: resident
            pl.BlockSpec((1, HIDDEN), lambda i: (0, 0)),    # w2: resident
            pl.BlockSpec((1, 1), lambda i: (0, 0)),         # b2: resident
        ],
        out_specs=pl.BlockSpec((tb, 1), lambda i: (i, 0)),
        compiler_params=pltpu.CompilerParams(
            dimension_semantics=("parallel",),              # megacore batch split on v7x
            vmem_limit_bytes=VMEM_LIMIT,
        ),
    )(x, w1t, b1r, w2r, b2r)


def ffnet_reference(x, w1, b1, w2, b2, *, norm_flag):
    x = x.astype(jnp.float32)
    if norm_flag:
        mean = jnp.mean(x, axis=-1, keepdims=True)
        var = jnp.mean((x - mean) ** 2, axis=-1, keepdims=True)
        x = (x - mean) * jax.lax.rsqrt(var + EPS)
    h = jnp.maximum(x @ w1.T + b1, 0.0)   # (B, 128)
    y = jnp.maximum(h @ w2.T + b2, 0.0)   # (B, 1)
    return y


def _make_params(key, d):
    # Deterministic params mimicking nn.Linear default init (uniform +/- 1/sqrt(fan_in)),
    # stored in PyTorch layout: weight (out, in), bias (out,).
    kw1, kb1, kw2, kb2 = jax.random.split(key, 4)
    bound1 = 1.0 / np.sqrt(d)
    w1 = jax.random.uniform(kw1, (HIDDEN, d), jnp.float32, -bound1, bound1)
    b1 = jax.random.uniform(kb1, (HIDDEN,), jnp.float32, -bound1, bound1)
    bound2 = 1.0 / np.sqrt(HIDDEN)
    w2 = jax.random.uniform(kw2, (1, HIDDEN), jnp.float32, -bound2, bound2)
    b2 = jax.random.uniform(kb2, (1,), jnp.float32, -bound2, bound2)
    return w1, b1, w2, b2


if __name__ == "__main__":
    key = jax.random.PRNGKey(0)

    # (B, D, norm_flag, forced batch-tile or None for the auto VMEM-derived one)
    cases = [
        (8, 32, True, None),      # small: single full block
        (16, 32, False, None),    # norm_flag=False path
        (300, 96, True, 128),     # multi-step grid + partial (masked) last block
    ]
    for idx, (B, D, norm_flag, tb) in enumerate(cases):
        kcase = jax.random.fold_in(key, idx)
        kx, kp = jax.random.split(kcase)
        x = jax.random.normal(kx, (B, D), dtype=jnp.float32)
        w1, b1, w2, b2 = _make_params(kp, D)

        out = ffnet_forward(x, w1, b1, w2, b2, norm_flag=norm_flag, tb=tb)
        out = jax.block_until_ready(out)

        ref = ffnet_reference(x, w1, b1, w2, b2, norm_flag=norm_flag)
        np.testing.assert_allclose(np.asarray(out), np.asarray(ref), rtol=5e-4, atol=1e-5)

    print("KERNEL_OK")
</pallas_src>

<mosaic_0001>
module attributes {stable_mosaic.version = 11 : i64} {
  func.func @ffnet_kernel(%arg0: i32, %arg1: memref<8x32xf32, #tpu.memory_space<vmem>>, %arg2: memref<32x128xf32, #tpu.memory_space<vmem>>, %arg3: memref<1x128xf32, #tpu.memory_space<vmem>>, %arg4: memref<1x128xf32, #tpu.memory_space<vmem>>, %arg5: memref<1x1xf32, #tpu.memory_space<vmem>>, %arg6: memref<8x1xf32, #tpu.memory_space<vmem>>) attributes {dimension_semantics = [#tpu.dimension_semantics<parallel>], iteration_bounds = array<i64: 1>, scalar_prefetch = 0 : i64, scratch_operands = 0 : i64, tpu.core_type = #tpu.core_type<tc>, window_params = [{transform_indices = @transform_0, window_bounds = array<i64: 8, 32>}, {pipeline_mode = #tpu.pipeline_mode<synchronous>, transform_indices = @transform_1, window_bounds = array<i64: 32, 128>}, {pipeline_mode = #tpu.pipeline_mode<synchronous>, transform_indices = @transform_2, window_bounds = array<i64: 1, 128>}, {pipeline_mode = #tpu.pipeline_mode<synchronous>, transform_indices = @transform_3, window_bounds = array<i64: 1, 128>}, {pipeline_mode = #tpu.pipeline_mode<synchronous>, transform_indices = @transform_4, window_bounds = array<i64: 1, 1>}, {transform_indices = @transform_5, window_bounds = array<i64: 8, 1>}]} {
    %c0 = arith.constant 0 : index
    %c0_0 = arith.constant 0 : index
    %0 = vector.load %arg1[%c0, %c0_0] : memref<8x32xf32, #tpu.memory_space<vmem>>, vector<8x32xf32>
    %cst = arith.constant dense<0.000000e+00> : vector<8xf32>
    %1 = vector.multi_reduction <add>, %0, %cst [1] : vector<8x32xf32> to vector<8xf32>
    %2 = vector.shape_cast %1 : vector<8xf32> to vector<8x1xf32>
    %cst_1 = arith.constant 3.125000e-02 : f32
    %3 = vector.broadcast %cst_1 : f32 to vector<8x1xf32>
    %4 = arith.mulf %2, %3 : vector<8x1xf32>
    %5 = vector.broadcast %4 : vector<8x1xf32> to vector<8x32xf32>
    %6 = arith.subf %0, %5 : vector<8x32xf32>
    %7 = arith.mulf %6, %6 : vector<8x32xf32>
    %cst_2 = arith.constant dense<0.000000e+00> : vector<8xf32>
    %8 = vector.multi_reduction <add>, %7, %cst_2 [1] : vector<8x32xf32> to vector<8xf32>
    %9 = vector.shape_cast %8 : vector<8xf32> to vector<8x1xf32>
    %cst_3 = arith.constant 3.125000e-02 : f32
    %10 = vector.broadcast %cst_3 : f32 to vector<8x1xf32>
    %11 = arith.mulf %9, %10 : vector<8x1xf32>
    %cst_4 = arith.constant 9.99999974E-6 : f32
    %12 = vector.broadcast %cst_4 : f32 to vector<8x1xf32>
    %13 = arith.addf %11, %12 : vector<8x1xf32>
    %14 = math.rsqrt %13 : vector<8x1xf32>
    %15 = vector.broadcast %14 : vector<8x1xf32> to vector<8x32xf32>
    %16 = arith.mulf %6, %15 : vector<8x32xf32>
    %c0_5 = arith.constant 0 : index
    %c0_6 = arith.constant 0 : index
    %17 = vector.load %arg2[%c0_5, %c0_6] : memref<32x128xf32, #tpu.memory_space<vmem>>, vector<32x128xf32>
    %cst_7 = arith.constant dense<0.000000e+00> : vector<8x128xf32>
    %18 = tpu.matmul %16, %17, %cst_7 {dimension_numbers = #tpu.dot_dimension_numbers<[1], [0], [0], [1], [0, 0, 1, 1], [], []>} : vector<8x32xf32>, vector<32x128xf32>, vector<8x128xf32> -> vector<8x128xf32>
    %c0_8 = arith.constant 0 : index
    %c0_9 = arith.constant 0 : index
    %19 = vector.load %arg3[%c0_8, %c0_9] : memref<1x128xf32, #tpu.memory_space<vmem>>, vector<1x128xf32>
    %20 = vector.broadcast %19 : vector<1x128xf32> to vector<8x128xf32>
    %21 = arith.addf %18, %20 : vector<8x128xf32>
    %cst_10 = arith.constant 0.000000e+00 : f32
    %22 = vector.broadcast %cst_10 : f32 to vector<8x128xf32>
    %23 = arith.maximumf %21, %22 : vector<8x128xf32>
    %c0_11 = arith.constant 0 : index
    %c0_12 = arith.constant 0 : index
    %24 = vector.load %arg4[%c0_11, %c0_12] : memref<1x128xf32, #tpu.memory_space<vmem>>, vector<1x128xf32>
    %25 = vector.broadcast %24 : vector<1x128xf32> to vector<8x128xf32>
    %26 = arith.mulf %23, %25 : vector<8x128xf32>
    %cst_13 = arith.constant dense<0.000000e+00> : vector<8xf32>
    %27 = vector.multi_reduction <add>, %26, %cst_13 [1] : vector<8x128xf32> to vector<8xf32>
    %28 = vector.shape_cast %27 : vector<8xf32> to vector<8x1xf32>
    %c0_14 = arith.constant 0 : index
    %c0_15 = arith.constant 0 : index
    %29 = vector.load %arg5[%c0_14, %c0_15] : memref<1x1xf32, #tpu.memory_space<vmem>>, vector<1x1xf32>
    %30 = vector.broadcast %29 : vector<1x1xf32> to vector<8x1xf32>
    %31 = arith.addf %28, %30 : vector<8x1xf32>
    %cst_16 = arith.constant 0.000000e+00 : f32
    %32 = vector.broadcast %cst_16 : f32 to vector<8x1xf32>
    %33 = arith.maximumf %31, %32 : vector<8x1xf32>
    %c0_17 = arith.constant 0 : index
    %c0_18 = arith.constant 0 : index
    %34 = vector.load %arg6[%c0_17, %c0_18] : memref<8x1xf32, #tpu.memory_space<vmem>>, vector<8x1xf32>
    tpu.vector_store %arg6[%c0_17, %c0_18], %33 {strides = array<i32>} : memref<8x1xf32, #tpu.memory_space<vmem>>, vector<8x1xf32>,
    return
  }
  func.func @transform_0(%arg0: i32) -> (i32, i32) {
    %c0_i32 = arith.constant 0 : i32
    %c0_i32_0 = arith.constant 0 : i32
    return %arg0, %c0_i32 : i32, i32
  }
  func.func @transform_1(%arg0: i32) -> (i32, i32) {
    %c0_i32 = arith.constant 0 : i32
    %c0_i32_0 = arith.constant 0 : i32
    %c0_i32_1 = arith.constant 0 : i32
    return %c0_i32, %c0_i32_0 : i32, i32
  }
  func.func @transform_2(%arg0: i32) -> (i32, i32) {
    %c0_i32 = arith.constant 0 : i32
    %c0_i32_0 = arith.constant 0 : i32
    %c0_i32_1 = arith.constant 0 : i32
    return %c0_i32, %c0_i32_0 : i32, i32
  }
  func.func @transform_3(%arg0: i32) -> (i32, i32) {
    %c0_i32 = arith.constant 0 : i32
    %c0_i32_0 = arith.constant 0 : i32
    %c0_i32_1 = arith.constant 0 : i32
    return %c0_i32, %c0_i32_0 : i32, i32
  }
  func.func @transform_4(%arg0: i32) -> (i32, i32) {
    %c0_i32 = arith.constant 0 : i32
    %c0_i32_0 = arith.constant 0 : i32
    %c0_i32_1 = arith.constant 0 : i32
    return %c0_i32, %c0_i32_0 : i32, i32
  }
  func.func @transform_5(%arg0: i32) -> (i32, i32) {
    %c0_i32 = arith.constant 0 : i32
    %c0_i32_0 = arith.constant 0 : i32
    return %arg0, %c0_i32 : i32, i32
  }
}

</mosaic_0001>

<llo_original>
// kernel: tpu_custom_call.1
$region0: #{tpu_custom_call.1}
  #allocation0 [shape = 'u32[]', space=smem, size = 0x4, offset = 0x4, fixed_abs, tag = 'smem constant byte address 0x4 - core index']
  #allocation1 [shape = 'u32[144,128]{1,0:T(1,128)}', space=vmem, size = 0x12000, scoped, tag = 'internal scratch']
  #allocation2 [shape = 'f32[1,1]{1,0:T(1,128)S(1)}', space=vmem, size = 0x200, scoped, tag = 'scoped memory for tpu_custom_call.1']
  %s0 = inlined_call_operand.hbm [shape: f32[8,32], index: 0, kind: input, shape index: {}]
  %s1 = inlined_call_operand.hbm [shape: f32[32,128], index: 1, kind: input, shape index: {}]
  %s2 = inlined_call_operand.vmem [shape: f32[1,128], index: 2, kind: input, shape index: {}]
  %s3 = inlined_call_operand.vmem [shape: f32[1,128], index: 3, kind: input, shape index: {}]
  %s4 = inlined_call_operand.<no memory space> [shape: f32[1,1], index: 4, kind: input, shape index: {}]
  %s5 = inlined_call_operand.vmem [shape: f32[8,1], index: 5, kind: output, shape index: {}]
  %s6 = sld [smem:[#allocation0]]
  $region38: #{tpu_custom_call.1} parent=0
    _
  %s8 = ssub.s32 1, %s6
  %s9 = scalar_select 0, %s8, %s6
  %v10 = vstv %s4
  %11 = vst [vmem:[#allocation2] sm:$0x1] %v10
  $region1: #{tpu_custom_call.1} parent=0
    #allocation3 [shape = 'u8[4096]{0}', space=vmem, size = 0x1000, scoped, tag = 'input window, operand 0, single buffered']
    #allocation4 [shape = 's32[1]{0}', space=sflag, size = 0x4, scoped, tag = 'scoped memory for tpu_custom_call.1']
    #allocation5 [shape = 'u8[16384]{0}', space=vmem, size = 0x4000, scoped, tag = 'input window, operand 1, single buffered']
    #allocation6 [shape = 's32[1]{0}', space=sflag, size = 0x4, scoped, tag = 'scoped memory for tpu_custom_call.1']
    %12 = vsyncpa [#allocation4], 0
    %13 = vsyncpa [#allocation6], 0
    // Predicated region
    $region2: #{tpu_custom_call.1} parent=1 // pred_check
      _
    $region3: #{tpu_custom_call.1} parent=1 // pred_check_branch
      %15 = sbr.rel (0) target = $region5
    $region4: #{tpu_custom_call.1} parent=1 // pred_region
      %s17 = ssub.s32 128, 128
      %18 = vsyncadd [#allocation4], %s17
      %s20 = sshll.u32 [#allocation3], 4
      %s21 = int_to_ptr.vmem [resolvable:$true] %s20
      %23 = dma.hbm_to_vmem [thread:$0]  %s0, 128, %s21, [#allocation4]
    $region5: #{tpu_custom_call.1} parent=1 // pred_fallthru
      _
    // Predicated region
    $region6: #{tpu_custom_call.1} parent=1 // pred_check
      _
    $region7: #{tpu_custom_call.1} parent=1 // pred_check_branch
      %25 = sbr.rel (0) target = $region9
    $region8: #{tpu_custom_call.1} parent=1 // pred_region
      %s27 = ssub.s32 512, 512
      %28 = vsyncadd [#allocation6], %s27
      %s29 = sshll.u32 [#allocation5], 4
      %s30 = int_to_ptr.vmem [resolvable:$true] %s29
      %35 = dma.hbm_to_vmem [thread:$0]  %s1, 512, %s30, [#allocation6], 128, 128, 8
    $region9: #{tpu_custom_call.1} parent=1 // pred_fallthru
      _
    // Predicated region
    $region10: #{tpu_custom_call.1} parent=1 // pred_check
      _
    $region11: #{tpu_custom_call.1} parent=1 // pred_check_branch
      %37 = sbr.rel (0) target = $region13
    $region12: #{tpu_custom_call.1} parent=1 // pred_region
      _
    $region13: #{tpu_custom_call.1} parent=1 // pred_fallthru
      _
    // Predicated region
    $region14: #{tpu_custom_call.1} parent=1 // pred_check
      _
    $region15: #{tpu_custom_call.1} parent=1 // pred_check_branch
      %39 = sbr.rel (0) target = $region17
    $region16: #{tpu_custom_call.1} parent=1 // pred_region
      _
    $region17: #{tpu_custom_call.1} parent=1 // pred_fallthru
      _
    // Predicated region
    $region18: #{tpu_custom_call.1} parent=1 // pred_check
      _
    $region19: #{tpu_custom_call.1} parent=1 // pred_check_branch
      %41 = sbr.rel (0) target = $region21
    $region20: #{tpu_custom_call.1} parent=1 // pred_region
      _
    $region21: #{tpu_custom_call.1} parent=1 // pred_fallthru
      _
    // Predicated region
    $region22: #{tpu_custom_call.1} parent=1 // pred_check
      _
    $region23: #{tpu_custom_call.1} parent=1 // pred_check_branch
      %43 = sbr.rel (0) target = $region25
    $region24: #{tpu_custom_call.1} parent=1 // pred_region
      %44 = dma.done [#allocation4], 128
    $region25: #{tpu_custom_call.1} parent=1 // pred_fallthru
      _
    // Predicated region
    $region26: #{tpu_custom_call.1} parent=1 // pred_check
      _
    $region27: #{tpu_custom_call.1} parent=1 // pred_check_branch
      %46 = sbr.rel (0) target = $region29
    $region28: #{tpu_custom_call.1} parent=1 // pred_region
      %47 = dma.done [#allocation6], 512
    $region29: #{tpu_custom_call.1} parent=1 // pred_fallthru
      _
    %v48 = vld [vmem:[#allocation3] sm:$0xff]
    %vm49 = vcmask 261120
    %v50 = vsel %vm49, %v48, 0.0
    %51 = vadd.xlane.f32.xlu0 %v50
    %v52 = vpop.xlane.xlu0 %51
    %v53 = vmul.f32 %v52, 0.03125
    %v54 = vsub.f32 %v48, %v53
    %v55 = vmul.f32 %v54, %v54
    %v56 = vsel %vm49, %v55, 0.0
    %57 = vadd.xlane.f32.xlu0 %v56
    %v58 = vpop.xlane.xlu0 %57
    %v59 = vmul.f32 %v58, 0.03125
    %v60 = vadd.f32 %v59, 1e-05
    %v61 = vrsqrt.pop %v60
    %v62 = vmul.f32 %v54, %v61
    %v63 = vld [vmem:[#allocation5] sm:$0xff]
    %v64 = vld [vmem:[#allocation5 + $0x8] sm:$0xff]
    %v65 = vld [vmem:[#allocation5 + $0x10] sm:$0xff]
    %v66 = vld [vmem:[#allocation5 + $0x18] sm:$0xff]
    %v67 = vld [vmem:[%s2] sm:$0x1]
    %v69 = vlaneseq
    %v70 = vshrl.u32 %v69, 7
    %v71 = vsub.s32 0, %v70
    %v72 = vrot.slane %v67, %v71
    %v75 = vsel %vm49, %v62, 0
    %77 = vmatprep.subr.mxu0 0.0
    %78 = vmatpush1.msra.mxu0 0.0
    %79 = vmatprep.subr.mxu0 0.0
    %80 = vmatpush1.msra.mxu0 0.0
    %81 = vmatprep.subr.mxu0 0.0
    %82 = vmatpush1.msra.mxu0 0.0
    %83 = vmatprep.subr.mxu0 0.0
    %84 = vmatpush1.msra.mxu0 0.0
    %85 = vmatprep.subr.mxu0 0.0
    %86 = vmatpush1.msra.mxu0 0.0
    %87 = vmatprep.subr.mxu0 0.0
    %88 = vmatpush1.msra.mxu0 0.0
    %89 = vmatprep.subr.mxu0 0.0
    %90 = vmatpush1.msra.mxu0 0.0
    %91 = vmatprep.subr.mxu0 0.0
    %92 = vmatpush1.msra.mxu0 0.0
    %93 = vmatprep.subr.mxu0 0.0
    %94 = vmatpush1.msra.mxu0 0.0
    %95 = vmatprep.subr.mxu0 0.0
    %96 = vmatpush1.msra.mxu0 0.0
    %97 = vmatprep.subr.mxu0 0.0
    %98 = vmatpush1.msra.mxu0 0.0
    %99 = vmatprep.subr.mxu0 0.0
    %100 = vmatpush1.msra.mxu0 0.0
    %101 = vmatprep.subr.mxu0 0.0
    %102 = vmatpush1.msra.mxu0 %v66
    %103 = vmatprep.subr.mxu0 0.0
    %104 = vmatpush1.msra.mxu0 %v65
    %105 = vmatprep.subr.mxu0 0.0
    %106 = vmatpush1.msra.mxu0 %v64
    %107 = vmatprep.subr.mxu0 0.0
    %108 = vmatpush1.msra.mxu0 %v63
    %109 = vmatprep.subr.mxu0 0.0
    %110 = vmatpush2.msra.mxu0 0.0
    %111 = vmatprep.subr.mxu0 0.0
    %112 = vmatpush2.msra.mxu0 0.0
    %113 = vmatprep.subr.mxu0 0.0
    %114 = vmatpush2.msra.mxu0 0.0
    %115 = vmatprep.subr.mxu0 0.0
    %116 = vmatpush2.msra.mxu0 0.0
    %117 = vmatprep.subr.mxu0 0.0
    %118 = vmatpush2.msra.mxu0 0.0
    %119 = vmatprep.subr.mxu0 0.0
    %120 = vmatpush2.msra.mxu0 0.0
    %121 = vmatprep.subr.mxu0 0.0
    %122 = vmatpush2.msra.mxu0 0.0
    %123 = vmatprep.subr.mxu0 0.0
    %124 = vmatpush2.msra.mxu0 0.0
    %125 = vmatprep.subr.mxu0 0.0
    %126 = vmatpush2.msra.mxu0 0.0
    %127 = vmatprep.subr.mxu0 0.0
    %128 = vmatpush2.msra.mxu0 0.0
    %129 = vmatprep.subr.mxu0 0.0
    %130 = vmatpush2.msra.mxu0 0.0
    %131 = vmatprep.subr.mxu0 0.0
    %132 = vmatpush2.msra.mxu0 0.0
    %133 = vmatprep.subr.mxu0 0.0
    %134 = vmatpush2.msra.mxu0 0.0
    %135 = vmatprep.subr.mxu0 0.0
    %136 = vmatpush2.msra.mxu0 0.0
    %137 = vmatprep.subr.mxu0 0.0
    %138 = vmatpush2.msra.mxu0 0.0
    %139 = vmatprep.subr.mxu0 0.0
    %140 = vmatpush2.msra.mxu0 0.0
    %141 = vmatprep.mubr.f32.mxu0 0.0
    %142 = vmatmul.mubr.f32.gmra.mxu0 %v75
    %v143 = vpop.f32.mrf.mxu0
    %v144 = vadd.f32 %v72, %v143
    %v145 = vpop.f32.mrf.mxu0
    %146 = vdwg.mxu0
    %v147 = vmax.f32 %v144, 0.0
    %v148 = vld [vmem:[%s3] sm:$0x1]
    %v150 = vlaneseq
    %v151 = vshrl.u32 %v150, 7
    %v152 = vsub.s32 0, %v151
    %v153 = vrot.slane %v148, %v152
    %v155 = vmul.f32 %v147, %v153
    %156 = vadd.xlane.f32.xlu0 %v155
    %v157 = vpop.xlane.xlu0 %156
    %v158 = vld [vmem:[#allocation2] sm:$0x1]
    %v160 = vlaneseq
    %v161 = vshrl.u32 %v160, 7
    %v162 = vsub.s32 0, %v161
    %v163 = vrot.slane %v158, %v162
    %v165 = vadd.f32 %v157, %v163
    %v166 = vmax.f32 %v165, 0.0
    %vm167 = vcmask 7168
    %168 = vst.msk [vmem:[%s5] sm:$0xff] %vm167, %v166
    // Predicated region
    $region30: #{tpu_custom_call.1} parent=1 // pred_check
      _
    $region31: #{tpu_custom_call.1} parent=1 // pred_check_branch
      %170 = sbr.rel (0) target = $region33
    $region32: #{tpu_custom_call.1} parent=1 // pred_region
      _
    $region33: #{tpu_custom_call.1} parent=1 // pred_fallthru
      _
    // Predicated region
    $region34: #{tpu_custom_call.1} parent=1 // pred_check
      _
    $region35: #{tpu_custom_call.1} parent=1 // pred_check_branch
      %172 = sbr.rel (0) target = $region37
    $region36: #{tpu_custom_call.1} parent=1 // pred_region
      _
    $region37: #{tpu_custom_call.1} parent=1 // pred_fallthru
      _
    %173 = vsyncpa [#allocation4], 1
    %174 = vsyncpa [#allocation6], 1

</llo_original>
